<compile_context>
chip_gen: v6e
topology: v6e:2x2x1
jax: 0.10.0
libtpu: 0.0.40
codegen_flags: <defaults>
</compile_context>

<pallas_src>
from functools import partial

import jax
import jax.numpy as jnp
from jax import lax
from jax.experimental import pallas as pl
from jax.experimental.pallas import tpu as pltpu

_BN_EPS = 1e-5


# ---------------------------------------------------------------------------
# Pallas kernel: one fused RepVGG block = GEMM + bias + ReLU
# ---------------------------------------------------------------------------
def _gemm_bias_relu_kernel(p_ref, w_ref, b_ref, o_ref):
    # p: (TILE_M, K) bf16   w: (K, Cout) bf16   b: (1, Cout) f32   o: (TILE_M, Cout) bf16
    acc = jnp.dot(p_ref[...], w_ref[...], preferred_element_type=jnp.float32)
    acc = acc + b_ref[...]
    o_ref[...] = jnp.maximum(acc, 0.0).astype(o_ref.dtype)


def _round_up(a, m):
    return (a + m - 1) // m * m


# ---------------------------------------------------------------------------
# One RepVGGBlock: im2col (glue) + row-tiled Pallas GEMM
# ---------------------------------------------------------------------------
@partial(jax.jit, static_argnames=("stride",))
def repvgg_block(x_nhwc, w, b, *, stride):
    N, H, W, Cin = x_nhwc.shape
    K, Cout = w.shape          # K == 9 * Cin
    Ho = (H + 2 - 3) // stride + 1
    Wo = (W + 2 - 3) // stride + 1

    # im2col patch extraction (glue, plain JAX): pad=1, kernel=3, column order (kh,kw,cin)
    xp = jnp.pad(x_nhwc, ((0, 0), (1, 1), (1, 1), (0, 0)))
    cols = []
    for kh in range(3):
        for kw in range(3):
            sl = lax.slice(
                xp,
                (0, kh, kw, 0),
                (N, kh + (Ho - 1) * stride + 1, kw + (Wo - 1) * stride + 1, Cin),
                (1, stride, stride, 1),
            )  # (N, Ho, Wo, Cin)
            cols.append(sl)
    M = N * Ho * Wo
    patches = jnp.concatenate(cols, axis=-1).reshape(M, K)

    # Row tiling: pad M to a multiple of the tile so every block is (8,128)-legal,
    # tile large enough (512 rows) to amortize per-grid-step overhead.
    m_pad8 = _round_up(M, 8)
    tile_m = min(512, m_pad8)
    m_pad = _round_up(M, tile_m)
    if m_pad != M:
        patches = jnp.pad(patches, ((0, m_pad - M), (0, 0)))

    grid = (m_pad // tile_m,)

    out = pl.pallas_call(
        _gemm_bias_relu_kernel,
        out_shape=jax.ShapeDtypeStruct((m_pad, Cout), jnp.bfloat16),
        grid=grid,
        in_specs=[
            pl.BlockSpec((tile_m, K), lambda i: (i, 0)),   # row tiles stream
            pl.BlockSpec((K, Cout), lambda i: (0, 0)),     # weight resident
            pl.BlockSpec((1, Cout), lambda i: (0, 0)),     # bias resident
        ],
        out_specs=pl.BlockSpec((tile_m, Cout), lambda i: (i, 0)),
        compiler_params=pltpu.CompilerParams(
            dimension_semantics=("parallel",),
            vmem_limit_bytes=48 * 1024 * 1024,
        ),
    )(patches, w, b)

    return out[:M].reshape(N, Ho, Wo, Cout)


# ---------------------------------------------------------------------------
# Deterministic synthetic parameters with BN folding + branch reparameterization
# ---------------------------------------------------------------------------
def _fold_conv_bn(key, cin, cout, ksize):
    kw_, kg, kb, km, kv = jax.random.split(key, 5)
    w = jax.random.normal(kw_, (cout, cin, ksize, ksize), jnp.float32) * 0.1
    gamma = jax.random.uniform(kg, (cout,), jnp.float32, 0.5, 1.5)
    beta = jax.random.normal(kb, (cout,), jnp.float32) * 0.1
    mean = jax.random.normal(km, (cout,), jnp.float32) * 0.1
    var = jax.random.uniform(kv, (cout,), jnp.float32, 0.5, 1.5)
    scale = gamma / jnp.sqrt(var + _BN_EPS)
    w_f = w * scale[:, None, None, None]
    b_f = beta - mean * scale
    return w_f, b_f


def _fold_bn(key, c):
    kg, kb, km, kv = jax.random.split(key, 4)
    gamma = jax.random.uniform(kg, (c,), jnp.float32, 0.5, 1.5)
    beta = jax.random.normal(kb, (c,), jnp.float32) * 0.1
    mean = jax.random.normal(km, (c,), jnp.float32) * 0.1
    var = jax.random.uniform(kv, (c,), jnp.float32, 0.5, 1.5)
    scale = gamma / jnp.sqrt(var + _BN_EPS)
    bias = beta - mean * scale
    return scale, bias


def _make_block_params(key, cin, cout, stride):
    """Fold conv+BN of all three branches into a single (9*Cin, Cout) weight + bias."""
    has_identity = (cin == cout) and (stride == 1)
    k3, k1, kid = jax.random.split(key, 3)

    # 3x3 branch (conv+BN folded), laid out to match im2col column order (kh, kw, cin)
    w3, b3 = _fold_conv_bn(k3, cin, cout, 3)                       # (Cout, Cin, 3, 3)
    w_fused = jnp.transpose(w3, (2, 3, 1, 0)).reshape(9 * cin, cout)
    b_fused = b3

    # 1x1 branch (pad=0, same stride) sees exactly the center tap -> rows [4*Cin, 5*Cin)
    w1, b1 = _fold_conv_bn(k1, cin, cout, 1)                       # (Cout, Cin, 1, 1)
    w1_mat = jnp.transpose(w1[:, :, 0, 0], (1, 0))                 # (Cin, Cout)
    c0 = 4 * cin
    w_fused = w_fused.at[c0:c0 + cin, :].add(w1_mat)
    b_fused = b_fused + b1

    # identity BN branch (only when Cin == Cout and stride == 1): diag scale on center tap
    if has_identity:
        id_scale, id_bias = _fold_bn(kid, cin)
        w_fused = w_fused.at[c0:c0 + cin, :].add(jnp.diag(id_scale))
        b_fused = b_fused + id_bias

    return {
        "stride": stride,
        "w": w_fused.astype(jnp.bfloat16),
        "b": b_fused.reshape(1, cout).astype(jnp.float32),
    }


def build_repvgg_a0(key):
    # RepVGG_A0: blocks=[2,4,14,1], width=[48,96,192,1280], deploy=False, use_se=False
    width = [48, 96, 192, 1280]
    num_blocks = [2, 4, 14, 1]
    in_channels = min(64, width[0])  # 48

    stages = []
    key, k = jax.random.split(key)
    stages.append(("stage1", [_make_block_params(k, 3, in_channels, 2)]))

    cur_in = in_channels
    for si, (planes, nb) in enumerate(zip(width, num_blocks)):
        strides = [2] + [1] * (nb - 1)
        blocks = []
        for s in strides:
            key, k = jax.random.split(key)
            blocks.append(_make_block_params(k, cur_in, planes, s))
            cur_in = planes
        stages.append((f"stage{si + 2}", blocks))
    return stages


def repvgg_forward(x_nchw, stages, out_features=("stage3", "stage4", "stage5")):
    # layout: accepts NCHW (like PyTorch), computes in NHWC/bf16, returns NCHW f32 maps.
    x = jnp.transpose(x_nchw, (0, 2, 3, 1)).astype(jnp.bfloat16)
    outputs = {}
    for name, blocks in stages:
        for p in blocks:
            x = repvgg_block(x, p["w"], p["b"], stride=p["stride"])
        outputs[name] = jnp.transpose(x, (0, 3, 1, 2)).astype(jnp.float32)
    return {k: v for k, v in outputs.items() if k in out_features}


if __name__ == "__main__":
    key = jax.random.PRNGKey(0)
    kx, kp = jax.random.split(key)

    # Small but architecture-consistent input: NCHW, 3 input channels.
    x = jax.random.normal(kx, (2, 3, 32, 32), jnp.float32)

    stages = build_repvgg_a0(kp)
    outs = repvgg_forward(x, stages)

    for k_ in ("stage3", "stage4", "stage5"):
        jax.block_until_ready(outs[k_])

    # Expected shapes for 32x32 input:
    # stage3 (2,96,4,4), stage4 (2,192,2,2), stage5 (2,1280,1,1)
    assert outs["stage3"].shape == (2, 96, 4, 4)
    assert outs["stage4"].shape == (2, 192, 2, 2)
    assert outs["stage5"].shape == (2, 1280, 1, 1)

    print("KERNEL_OK")
</pallas_src>

<mosaic_0001>
module attributes {stable_mosaic.version = 11 : i64} {
  func.func @_gemm_bias_relu_kernel(%arg0: i32, %arg1: memref<512x27xbf16, #tpu.memory_space<vmem>>, %arg2: memref<27x48xbf16, #tpu.memory_space<vmem>>, %arg3: memref<1x48xf32, #tpu.memory_space<vmem>>, %arg4: memref<512x48xbf16, #tpu.memory_space<vmem>>) attributes {dimension_semantics = [#tpu.dimension_semantics<parallel>], iteration_bounds = array<i64: 1>, scalar_prefetch = 0 : i64, scratch_operands = 0 : i64, tpu.core_type = #tpu.core_type<tc>, window_params = [{transform_indices = @transform_0, window_bounds = array<i64: 512, 27>}, {pipeline_mode = #tpu.pipeline_mode<synchronous>, transform_indices = @transform_1, window_bounds = array<i64: 27, 48>}, {pipeline_mode = #tpu.pipeline_mode<synchronous>, transform_indices = @transform_2, window_bounds = array<i64: 1, 48>}, {transform_indices = @transform_3, window_bounds = array<i64: 512, 48>}]} {
    %c0 = arith.constant 0 : index
    %c0_0 = arith.constant 0 : index
    %0 = vector.load %arg1[%c0, %c0_0] : memref<512x27xbf16, #tpu.memory_space<vmem>>, vector<512x27xbf16>
    %c0_1 = arith.constant 0 : index
    %c0_2 = arith.constant 0 : index
    %1 = vector.load %arg2[%c0_1, %c0_2] : memref<27x48xbf16, #tpu.memory_space<vmem>>, vector<27x48xbf16>
    %cst = arith.constant dense<0.000000e+00> : vector<512x48xf32>
    %2 = tpu.matmul %0, %1, %cst {dimension_numbers = #tpu.dot_dimension_numbers<[1], [0], [0], [1], [0, 0, 1, 1], [], []>} : vector<512x27xbf16>, vector<27x48xbf16>, vector<512x48xf32> -> vector<512x48xf32>
    %c0_3 = arith.constant 0 : index
    %c0_4 = arith.constant 0 : index
    %3 = vector.load %arg3[%c0_3, %c0_4] : memref<1x48xf32, #tpu.memory_space<vmem>>, vector<1x48xf32>
    %4 = vector.broadcast %3 : vector<1x48xf32> to vector<512x48xf32>
    %5 = arith.addf %2, %4 : vector<512x48xf32>
    %cst_5 = arith.constant 0.000000e+00 : f32
    %6 = vector.broadcast %cst_5 : f32 to vector<512x48xf32>
    %7 = arith.maximumf %5, %6 : vector<512x48xf32>
    %8 = arith.truncf %7 : vector<512x48xf32> to vector<512x48xbf16>
    %c0_6 = arith.constant 0 : index
    %c0_7 = arith.constant 0 : index
    %9 = vector.load %arg4[%c0_6, %c0_7] : memref<512x48xbf16, #tpu.memory_space<vmem>>, vector<512x48xbf16>
    tpu.vector_store %arg4[%c0_6, %c0_7], %8 {strides = array<i32>} : memref<512x48xbf16, #tpu.memory_space<vmem>>, vector<512x48xbf16>,
    return
  }
  func.func @transform_0(%arg0: i32) -> (i32, i32) {
    %c0_i32 = arith.constant 0 : i32
    %c0_i32_0 = arith.constant 0 : i32
    return %arg0, %c0_i32 : i32, i32
  }
  func.func @transform_1(%arg0: i32) -> (i32, i32) {
    %c0_i32 = arith.constant 0 : i32
    %c0_i32_0 = arith.constant 0 : i32
    %c0_i32_1 = arith.constant 0 : i32
    return %c0_i32, %c0_i32_0 : i32, i32
  }
  func.func @transform_2(%arg0: i32) -> (i32, i32) {
    %c0_i32 = arith.constant 0 : i32
    %c0_i32_0 = arith.constant 0 : i32
    %c0_i32_1 = arith.constant 0 : i32
    return %c0_i32, %c0_i32_0 : i32, i32
  }
  func.func @transform_3(%arg0: i32) -> (i32, i32) {
    %c0_i32 = arith.constant 0 : i32
    %c0_i32_0 = arith.constant 0 : i32
    return %arg0, %c0_i32 : i32, i32
  }
}

</mosaic_0001>

<llo_original>
// kernel: repvgg_block.1
$region0: #{repvgg_block.1}
  #allocation0 [shape = 'u32[]', space=smem, size = 0x4, offset = 0x4, fixed_abs, tag = 'smem constant byte address 0x4 - core index']
  #allocation1 [shape = 'u32[144,128]{1,0:T(1,128)}', space=vmem, size = 0x12000, scoped, tag = 'internal scratch']
  %s0 = inlined_call_operand.vmem [shape: bf16[512,27], index: 0, kind: input, shape index: {}]
  %s1 = inlined_call_operand.vmem [shape: bf16[27,48], index: 1, kind: input, shape index: {}]
  %s2 = inlined_call_operand.vmem [shape: f32[1,48], index: 2, kind: input, shape index: {}]
  %s3 = inlined_call_operand.hbm [shape: bf16[512,48], index: 3, kind: output, shape index: {}]
  %s4 = sld [smem:[#allocation0]]
  $region22: #{repvgg_block.1} parent=0
    _
  %s6 = ssub.s32 1, %s4
  %s7 = scalar_select 0, %s6, %s4
  $region1: #{repvgg_block.1} parent=0
    #allocation2 [shape = 'u8[131072]{0}', space=vmem, size = 0x20000, scoped, tag = 'output window, operand 0, single buffered']
    #allocation3 [shape = 's32[1]{0}', space=sflag, size = 0x4, scoped, tag = 'scoped memory for repvgg_block.1']
    %8 = vsyncpa [#allocation3], 0
    // Predicated region
    $region2: #{repvgg_block.1} parent=1 // pred_check
      _
    $region3: #{repvgg_block.1} parent=1 // pred_check_branch
      %10 = sbr.rel (0) target = $region5
    $region4: #{repvgg_block.1} parent=1 // pred_region
      _
    $region5: #{repvgg_block.1} parent=1 // pred_fallthru
      _
    // Predicated region
    $region6: #{repvgg_block.1} parent=1 // pred_check
      _
    $region7: #{repvgg_block.1} parent=1 // pred_check_branch
      %12 = sbr.rel (0) target = $region9
    $region8: #{repvgg_block.1} parent=1 // pred_region
      _
    $region9: #{repvgg_block.1} parent=1 // pred_fallthru
      _
    // Predicated region
    $region10: #{repvgg_block.1} parent=1 // pred_check
      _
    $region11: #{repvgg_block.1} parent=1 // pred_check_branch
      %14 = sbr.rel (0) target = $region13
    $region12: #{repvgg_block.1} parent=1 // pred_region
      _
    $region13: #{repvgg_block.1} parent=1 // pred_fallthru
      _
    %v16 = vld [vmem:[%s0] sm:$0xf]
    %v17 = vld [vmem:[%s0 + $0x4] sm:$0xf]
    %v18 = vld [vmem:[%s0 + $0x8] sm:$0xf]
    %v19 = vld [vmem:[%s0 + $0xc] sm:$0xf]
    %v20 = vld [vmem:[%s0 + $0x10] sm:$0xf]
    %v21 = vld [vmem:[%s0 + $0x14] sm:$0xf]
    %v22 = vld [vmem:[%s0 + $0x18] sm:$0xf]
    %v23 = vld [vmem:[%s0 + $0x1c] sm:$0xf]
    %v24 = vld [vmem:[%s0 + $0x20] sm:$0xf]
    %v25 = vld [vmem:[%s0 + $0x24] sm:$0xf]
    %v26 = vld [vmem:[%s0 + $0x28] sm:$0xf]
    %v27 = vld [vmem:[%s0 + $0x2c] sm:$0xf]
    %v28 = vld [vmem:[%s0 + $0x30] sm:$0xf]
    %v29 = vld [vmem:[%s0 + $0x34] sm:$0xf]
    %v30 = vld [vmem:[%s0 + $0x38] sm:$0xf]
    %v31 = vld [vmem:[%s0 + $0x3c] sm:$0xf]
    %v32 = vld [vmem:[%s0 + $0x40] sm:$0xf]
    %v33 = vld [vmem:[%s0 + $0x44] sm:$0xf]
    %v34 = vld [vmem:[%s0 + $0x48] sm:$0xf]
    %v35 = vld [vmem:[%s0 + $0x4c] sm:$0xf]
    %v36 = vld [vmem:[%s0 + $0x50] sm:$0xf]
    %v37 = vld [vmem:[%s0 + $0x54] sm:$0xf]
    %v38 = vld [vmem:[%s0 + $0x58] sm:$0xf]
    %v39 = vld [vmem:[%s0 + $0x5c] sm:$0xf]
    %v40 = vld [vmem:[%s0 + $0x60] sm:$0xf]
    %v41 = vld [vmem:[%s0 + $0x64] sm:$0xf]
    %v42 = vld [vmem:[%s0 + $0x68] sm:$0xf]
    %v43 = vld [vmem:[%s0 + $0x6c] sm:$0xf]
    %v44 = vld [vmem:[%s0 + $0x70] sm:$0xf]
    %v45 = vld [vmem:[%s0 + $0x74] sm:$0xf]
    %v46 = vld [vmem:[%s0 + $0x78] sm:$0xf]
    %v47 = vld [vmem:[%s0 + $0x7c] sm:$0xf]
    %v48 = vld [vmem:[%s0 + $0x80] sm:$0xf]
    %v49 = vld [vmem:[%s0 + $0x84] sm:$0xf]
    %v50 = vld [vmem:[%s0 + $0x88] sm:$0xf]
    %v51 = vld [vmem:[%s0 + $0x8c] sm:$0xf]
    %v52 = vld [vmem:[%s0 + $0x90] sm:$0xf]
    %v53 = vld [vmem:[%s0 + $0x94] sm:$0xf]
    %v54 = vld [vmem:[%s0 + $0x98] sm:$0xf]
    %v55 = vld [vmem:[%s0 + $0x9c] sm:$0xf]
    %v56 = vld [vmem:[%s0 + $0xa0] sm:$0xf]
    %v57 = vld [vmem:[%s0 + $0xa4] sm:$0xf]
    %v58 = vld [vmem:[%s0 + $0xa8] sm:$0xf]
    %v59 = vld [vmem:[%s0 + $0xac] sm:$0xf]
    %v60 = vld [vmem:[%s0 + $0xb0] sm:$0xf]
    %v61 = vld [vmem:[%s0 + $0xb4] sm:$0xf]
    %v62 = vld [vmem:[%s0 + $0xb8] sm:$0xf]
    %v63 = vld [vmem:[%s0 + $0xbc] sm:$0xf]
    %v64 = vld [vmem:[%s0 + $0xc0] sm:$0xf]
    %v65 = vld [vmem:[%s0 + $0xc4] sm:$0xf]
    %v66 = vld [vmem:[%s0 + $0xc8] sm:$0xf]
    %v67 = vld [vmem:[%s0 + $0xcc] sm:$0xf]
    %v68 = vld [vmem:[%s0 + $0xd0] sm:$0xf]
    %v69 = vld [vmem:[%s0 + $0xd4] sm:$0xf]
    %v70 = vld [vmem:[%s0 + $0xd8] sm:$0xf]
    %v71 = vld [vmem:[%s0 + $0xdc] sm:$0xf]
    %v72 = vld [vmem:[%s0 + $0xe0] sm:$0xf]
    %v73 = vld [vmem:[%s0 + $0xe4] sm:$0xf]
    %v74 = vld [vmem:[%s0 + $0xe8] sm:$0xf]
    %v75 = vld [vmem:[%s0 + $0xec] sm:$0xf]
    %v76 = vld [vmem:[%s0 + $0xf0] sm:$0xf]
    %v77 = vld [vmem:[%s0 + $0xf4] sm:$0xf]
    %v78 = vld [vmem:[%s0 + $0xf8] sm:$0xf]
    %v79 = vld [vmem:[%s0 + $0xfc] sm:$0xf]
    %v80 = vld [vmem:[%s1] sm:$0xf]
    %v81 = vld [vmem:[%s1 + $0x4] sm:$0xf]
    %v82 = vld [vmem:[%s1 + $0x8] sm:$0xf]
    %v83 = vld [vmem:[%s1 + $0xc] sm:$0x3]
    %v84 = vld [vmem:[%s2] sm:$0x1]
    %v86 = vlaneseq
    %v87 = vshrl.u32 %v86, 7
    %v88 = vsub.s32 0, %v87
    %v89 = vrot.slane %v84, %v88
    %v155 = vunpack.c.l.b16 %v16
    %v156 = vunpack.c.l.b16 %v17
    %v157 = vunpack.c.l.b16 %v18
    %v158 = vunpack.c.l.b16 %v19
    %v159 = vunpack.c.l.b16 %v20
    %v160 = vunpack.c.l.b16 %v21
    %v161 = vunpack.c.l.b16 %v22
    %v162 = vunpack.c.l.b16 %v23
    %v163 = vunpack.c.l.b16 %v24
    %v164 = vunpack.c.l.b16 %v25
    %v165 = vunpack.c.l.b16 %v26
    %v166 = vunpack.c.l.b16 %v27
    %v167 = vunpack.c.l.b16 %v28
    %v168 = vunpack.c.l.b16 %v29
    %v169 = vunpack.c.l.b16 %v30
    %v170 = vunpack.c.l.b16 %v31
    %v171 = vunpack.c.l.b16 %v32
    %v172 = vunpack.c.l.b16 %v33
    %v173 = vunpack.c.l.b16 %v34
    %v174 = vunpack.c.l.b16 %v35
    %v175 = vunpack.c.l.b16 %v36
    %v176 = vunpack.c.l.b16 %v37
    %v177 = vunpack.c.l.b16 %v38
    %v178 = vunpack.c.l.b16 %v39
    %v179 = vunpack.c.l.b16 %v40
    %v180 = vunpack.c.l.b16 %v41
    %v181 = vunpack.c.l.b16 %v42
    %v182 = vunpack.c.l.b16 %v43
    %v183 = vunpack.c.l.b16 %v44
    %v184 = vunpack.c.l.b16 %v45
    %v185 = vunpack.c.l.b16 %v46
    %v186 = vunpack.c.l.b16 %v47
    %v187 = vunpack.c.l.b16 %v48
    %v188 = vunpack.c.l.b16 %v49
    %v189 = vunpack.c.l.b16 %v50
    %v190 = vunpack.c.l.b16 %v51
    %v191 = vunpack.c.l.b16 %v52
    %v192 = vunpack.c.l.b16 %v53
    %v193 = vunpack.c.l.b16 %v54
    %v194 = vunpack.c.l.b16 %v55
    %v195 = vunpack.c.l.b16 %v56
    %v196 = vunpack.c.l.b16 %v57
    %v197 = vunpack.c.l.b16 %v58
    %v198 = vunpack.c.l.b16 %v59
    %v199 = vunpack.c.l.b16 %v60
    %v200 = vunpack.c.l.b16 %v61
    %v201 = vunpack.c.l.b16 %v62
    %v202 = vunpack.c.l.b16 %v63
    %v203 = vunpack.c.l.b16 %v64
    %v204 = vunpack.c.l.b16 %v65
    %v205 = vunpack.c.l.b16 %v66
    %v206 = vunpack.c.l.b16 %v67
    %v207 = vunpack.c.l.b16 %v68
    %v208 = vunpack.c.l.b16 %v69
    %v209 = vunpack.c.l.b16 %v70
    %v210 = vunpack.c.l.b16 %v71
    %v211 = vunpack.c.l.b16 %v72
    %v212 = vunpack.c.l.b16 %v73
    %v213 = vunpack.c.l.b16 %v74
    %v214 = vunpack.c.l.b16 %v75
    %v215 = vunpack.c.l.b16 %v76
    %v216 = vunpack.c.l.b16 %v77
    %v217 = vunpack.c.l.b16 %v78
    %v218 = vunpack.c.l.b16 %v79
    %v219 = vpack.c.b16 %v156, %v155
    %v220 = vpack.c.b16 %v158, %v157
    %v221 = vpack.c.b16 %v160, %v159
    %v222 = vpack.c.b16 %v162, %v161
    %v223 = vpack.c.b16 %v164, %v163
    %v224 = vpack.c.b16 %v166, %v165
    %v225 = vpack.c.b16 %v168, %v167
    %v226 = vpack.c.b16 %v170, %v169
    %v227 = vpack.c.b16 %v172, %v171
    %v228 = vpack.c.b16 %v174, %v173
    %v229 = vpack.c.b16 %v176, %v175
    %v230 = vpack.c.b16 %v178, %v177
    %v231 = vpack.c.b16 %v180, %v179
    %v232 = vpack.c.b16 %v182, %v181
    %v233 = vpack.c.b16 %v184, %v183
    %v234 = vpack.c.b16 %v186, %v185
    %v235 = vpack.c.b16 %v188, %v187
    %v236 = vpack.c.b16 %v190, %v189
    %v237 = vpack.c.b16 %v192, %v191
    %v238 = vpack.c.b16 %v194, %v193
    %v239 = vpack.c.b16 %v196, %v195
    %v240 = vpack.c.b16 %v198, %v197
    %v241 = vpack.c.b16 %v200, %v199
    %v242 = vpack.c.b16 %v202, %v201
    %v243 = vpack.c.b16 %v204, %v203
    %v244 = vpack.c.b16 %v206, %v205
    %v245 = vpack.c.b16 %v208, %v207
    %v246 = vpack.c.b16 %v210, %v209
    %v247 = vpack.c.b16 %v212, %v211
    %v248 = vpack.c.b16 %v214, %v213
    %v249 = vpack.c.b16 %v216, %v215
    %v250 = vpack.c.b16 %v218, %v217
    %v255 = vunpack.c.l.b16 %v80
    %v256 = vunpack.c.l.b16 %v81
    %v257 = vunpack.c.l.b16 %v82
    %v258 = vunpack.c.l.b16 %v83
    %v259 = vpack.c.b16 %v256, %v255
    %v260 = vpack.c.b16 %v258, %v257
    %vm262 = vcmask 220160
    %v264 = vsel %vm262, %v219, 0
    %v267 = vsel %vm262, %v220, 0
    %v270 = vsel %vm262, %v221, 0
    %v273 = vsel %vm262, %v222, 0
    %v276 = vsel %vm262, %v223, 0
    %v279 = vsel %vm262, %v224, 0
    %v282 = vsel %vm262, %v225, 0
    %v285 = vsel %vm262, %v226, 0
    %v288 = vsel %vm262, %v227, 0
    %v291 = vsel %vm262, %v228, 0
    %v294 = vsel %vm262, %v229, 0
    %v297 = vsel %vm262, %v230, 0
    %v300 = vsel %vm262, %v231, 0
    %v303 = vsel %vm262, %v232, 0
    %v306 = vsel %vm262, %v233, 0
    %v309 = vsel %vm262, %v234, 0
    %v312 = vsel %vm262, %v235, 0
    %v315 = vsel %vm262, %v236, 0
    %v318 = vsel %vm262, %v237, 0
    %v321 = vsel %vm262, %v238, 0
    %v324 = vsel %vm262, %v239, 0
    %v327 = vsel %vm262, %v240, 0
    %v330 = vsel %vm262, %v241, 0
    %v333 = vsel %vm262, %v242, 0
    %v336 = vsel %vm262, %v243, 0
    %v339 = vsel %vm262, %v244, 0
    %v342 = vsel %vm262, %v245, 0
    %v345 = vsel %vm262, %v246, 0
    %v348 = vsel %vm262, %v247, 0
    %v351 = vsel %vm262, %v248, 0
    %v354 = vsel %vm262, %v249, 0
    %v357 = vsel %vm262, %v250, 0
    %vm359 = vcmask 1044480
    %vm360 = vcmask 1045504
    %v361 = vsel %vm359, 4294967295, 65535
    %v362 = vsel %vm360, %v361, 0
    %v364 = vand.u32 %v260, %v362
    %366 = vmatprep.subr.bf16.mxu0 0
    %367 = vmatpush1.bf16.msra.mxu0 0
    %368 = vmatprep.subr.bf16.mxu0 0
    %369 = vmatpush1.bf16.msra.mxu0 0
    %370 = vmatprep.subr.bf16.mxu0 0
    %371 = vmatpush1.bf16.msra.mxu0 0
    %372 = vmatprep.subr.bf16.mxu0 0
    %373 = vmatpush1.bf16.msra.mxu0 0
    %374 = vmatprep.subr.bf16.mxu0 0
    %375 = vmatpush1.bf16.msra.mxu0 0
    %376 = vmatprep.subr.bf16.mxu0 0
    %377 = vmatpush1.bf16.msra.mxu0 0
    %378 = vmatprep.subr.bf16.mxu0 0
    %379 = vmatpush1.bf16.msra.mxu0 %v364
    %380 = vmatprep.subr.bf16.mxu0 0
    %381 = vmatpush1.bf16.msra.mxu0 %v259
    %382 = vmatprep.subr.bf16.mxu0 0
    %383 = vmatpush2.bf16.msra.mxu0 0
    %384 = vmatprep.subr.bf16.mxu0 0
    %385 = vmatpush2.bf16.msra.mxu0 0
    %386 = vmatprep.subr.bf16.mxu0 0
    %387 = vmatpush2.bf16.msra.mxu0 0
    %388 = vmatprep.subr.bf16.mxu0 0
    %389 = vmatpush2.bf16.msra.mxu0 0
    %390 = vmatprep.subr.bf16.mxu0 0
    %391 = vmatpush2.bf16.msra.mxu0 0
    %392 = vmatprep.subr.bf16.mxu0 0
    %393 = vmatpush2.bf16.msra.mxu0 0
    %394 = vmatprep.subr.bf16.mxu0 0
    %395 = vmatpush2.bf16.msra.mxu0 0
    %396 = vmatprep.subr.bf16.mxu0 0
    %397 = vmatpush2.bf16.msra.mxu0 0
    %398 = vmatprep.mubr.bf16.mxu0 0
    %399 = vmatmul.mubr.bf16.gmra.mxu0 %v264
    %v400 = vpop.f32.mrf.mxu0
    %v401 = vadd.f32 %v89, %v400
    %v402 = vpop.f32.mrf.mxu0
    %v403 = vpop.f32.mrf.mxu0
    %v404 = vadd.f32 %v89, %v403
    %v405 = vpop.f32.mrf.mxu0
    %406 = vmatprep.mubr.bf16.mxu0 0
    %407 = vmatmul.mubr.bf16.gmra.mxu0 %v267
    %v408 = vpop.f32.mrf.mxu0
    %v409 = vadd.f32 %v89, %v408
    %v410 = vpop.f32.mrf.mxu0
    %v411 = vpop.f32.mrf.mxu0
    %v412 = vadd.f32 %v89, %v411
    %v413 = vpop.f32.mrf.mxu0
    %414 = vmatprep.mubr.bf16.mxu0 0
    %415 = vmatmul.mubr.bf16.gmra.mxu0 %v270
    %v416 = vpop.f32.mrf.mxu0
    %v417 = vadd.f32 %v89, %v416
    %v418 = vpop.f32.mrf.mxu0
    %v419 = vpop.f32.mrf.mxu0
    %v420 = vadd.f32 %v89, %v419
    %v421 = vpop.f32.mrf.mxu0
    %422 = vmatprep.mubr.bf16.mxu0 0
    %423 = vmatmul.mubr.bf16.gmra.mxu0 %v273
    %v424 = vpop.f32.mrf.mxu0
    %v425 = vadd.f32 %v89, %v424
    %v426 = vpop.f32.mrf.mxu0
    %v427 = vpop.f32.mrf.mxu0
    %v428 = vadd.f32 %v89, %v427
    %v429 = vpop.f32.mrf.mxu0
    %430 = vmatprep.mubr.bf16.mxu0 0
    %431 = vmatmul.mubr.bf16.gmra.mxu0 %v276
    %v432 = vpop.f32.mrf.mxu0
    %v433 = vadd.f32 %v89, %v432
    %v434 = vpop.f32.mrf.mxu0
    %v435 = vpop.f32.mrf.mxu0
    %v436 = vadd.f32 %v89, %v435
    %v437 = vpop.f32.mrf.mxu0
    %438 = vmatprep.mubr.bf16.mxu0 0
    %439 = vmatmul.mubr.bf16.gmra.mxu0 %v279
    %v440 = vpop.f32.mrf.mxu0
    %v441 = vadd.f32 %v89, %v440
    %v442 = vpop.f32.mrf.mxu0
    %v443 = vpop.f32.mrf.mxu0
    %v444 = vadd.f32 %v89, %v443
    %v445 = vpop.f32.mrf.mxu0
    %446 = vmatprep.mubr.bf16.mxu0 0
    %447 = vmatmul.mubr.bf16.gmra.mxu0 %v282
    %v448 = vpop.f32.mrf.mxu0
    %v449 = vadd.f32 %v89, %v448
    %v450 = vpop.f32.mrf.mxu0
    %v451 = vpop.f32.mrf.mxu0
    %v452 = vadd.f32 %v89, %v451
    %v453 = vpop.f32.mrf.mxu0
    %454 = vmatprep.mubr.bf16.mxu0 0
    %455 = vmatmul.mubr.bf16.gmra.mxu0 %v285
    %v456 = vpop.f32.mrf.mxu0
    %v457 = vadd.f32 %v89, %v456
    %v458 = vpop.f32.mrf.mxu0
    %v459 = vpop.f32.mrf.mxu0
    %v460 = vadd.f32 %v89, %v459
    %v461 = vpop.f32.mrf.mxu0
    %462 = vmatprep.mubr.bf16.mxu0 0
    %463 = vmatmul.mubr.bf16.gmra.mxu0 %v288
    %v464 = vpop.f32.mrf.mxu0
    %v465 = vadd.f32 %v89, %v464
    %v466 = vpop.f32.mrf.mxu0
    %v467 = vpop.f32.mrf.mxu0
    %v468 = vadd.f32 %v89, %v467
    %v469 = vpop.f32.mrf.mxu0
    %470 = vmatprep.mubr.bf16.mxu0 0
    %471 = vmatmul.mubr.bf16.gmra.mxu0 %v291
    %v472 = vpop.f32.mrf.mxu0
    %v473 = vadd.f32 %v89, %v472
    %v474 = vpop.f32.mrf.mxu0
    %v475 = vpop.f32.mrf.mxu0
    %v476 = vadd.f32 %v89, %v475
    %v477 = vpop.f32.mrf.mxu0
    %478 = vmatprep.mubr.bf16.mxu0 0
    %479 = vmatmul.mubr.bf16.gmra.mxu0 %v294
    %v480 = vpop.f32.mrf.mxu0
    %v481 = vadd.f32 %v89, %v480
    %v482 = vpop.f32.mrf.mxu0
    %v483 = vpop.f32.mrf.mxu0
    %v484 = vadd.f32 %v89, %v483
    %v485 = vpop.f32.mrf.mxu0
    %486 = vmatprep.mubr.bf16.mxu0 0
    %487 = vmatmul.mubr.bf16.gmra.mxu0 %v297
    %v488 = vpop.f32.mrf.mxu0
    %v489 = vadd.f32 %v89, %v488
    %v490 = vpop.f32.mrf.mxu0
    %v491 = vpop.f32.mrf.mxu0
    %v492 = vadd.f32 %v89, %v491
    %v493 = vpop.f32.mrf.mxu0
    %494 = vmatprep.mubr.bf16.mxu0 0
    %495 = vmatmul.mubr.bf16.gmra.mxu0 %v300
    %v496 = vpop.f32.mrf.mxu0
    %v497 = vadd.f32 %v89, %v496
    %v498 = vpop.f32.mrf.mxu0
    %v499 = vpop.f32.mrf.mxu0
    %v500 = vadd.f32 %v89, %v499
    %v501 = vpop.f32.mrf.mxu0
    %502 = vmatprep.mubr.bf16.mxu0 0
    %503 = vmatmul.mubr.bf16.gmra.mxu0 %v303
    %v504 = vpop.f32.mrf.mxu0
    %v505 = vadd.f32 %v89, %v504
    %v506 = vpop.f32.mrf.mxu0
    %v507 = vpop.f32.mrf.mxu0
    %v508 = vadd.f32 %v89, %v507
    %v509 = vpop.f32.mrf.mxu0
    %510 = vmatprep.mubr.bf16.mxu0 0
    %511 = vmatmul.mubr.bf16.gmra.mxu0 %v306
    %v512 = vpop.f32.mrf.mxu0
    %v513 = vadd.f32 %v89, %v512
    %v514 = vpop.f32.mrf.mxu0
    %v515 = vpop.f32.mrf.mxu0
    %v516 = vadd.f32 %v89, %v515
    %v517 = vpop.f32.mrf.mxu0
    %518 = vmatprep.mubr.bf16.mxu0 0
    %519 = vmatmul.mubr.bf16.gmra.mxu0 %v309
    %v520 = vpop.f32.mrf.mxu0
    %v521 = vadd.f32 %v89, %v520
    %v522 = vpop.f32.mrf.mxu0
    %v523 = vpop.f32.mrf.mxu0
    %v524 = vadd.f32 %v89, %v523
    %v525 = vpop.f32.mrf.mxu0
    %526 = vmatprep.mubr.bf16.mxu0 0
    %527 = vmatmul.mubr.bf16.gmra.mxu0 %v312
    %v528 = vpop.f32.mrf.mxu0
    %v529 = vadd.f32 %v89, %v528
    %v530 = vpop.f32.mrf.mxu0
    %v531 = vpop.f32.mrf.mxu0
    %v532 = vadd.f32 %v89, %v531
    %v533 = vpop.f32.mrf.mxu0
    %534 = vmatprep.mubr.bf16.mxu0 0
    %535 = vmatmul.mubr.bf16.gmra.mxu0 %v315
    %v536 = vpop.f32.mrf.mxu0
    %v537 = vadd.f32 %v89, %v536
    %v538 = vpop.f32.mrf.mxu0
    %v539 = vpop.f32.mrf.mxu0
    %v540 = vadd.f32 %v89, %v539
    %v541 = vpop.f32.mrf.mxu0
    %542 = vmatprep.mubr.bf16.mxu0 0
    %543 = vmatmul.mubr.bf16.gmra.mxu0 %v318
    %v544 = vpop.f32.mrf.mxu0
    %v545 = vadd.f32 %v89, %v544
    %v546 = vpop.f32.mrf.mxu0
    %v547 = vpop.f32.mrf.mxu0
    %v548 = vadd.f32 %v89, %v547
    %v549 = vpop.f32.mrf.mxu0
    %550 = vmatprep.mubr.bf16.mxu0 0
    %551 = vmatmul.mubr.bf16.gmra.mxu0 %v321
    %v552 = vpop.f32.mrf.mxu0
    %v553 = vadd.f32 %v89, %v552
    %v554 = vpop.f32.mrf.mxu0
    %v555 = vpop.f32.mrf.mxu0
    %v556 = vadd.f32 %v89, %v555
    %v557 = vpop.f32.mrf.mxu0
    %558 = vmatprep.mubr.bf16.mxu0 0
    %559 = vmatmul.mubr.bf16.gmra.mxu0 %v324
    %v560 = vpop.f32.mrf.mxu0
    %v561 = vadd.f32 %v89, %v560
    %v562 = vpop.f32.mrf.mxu0
    %v563 = vpop.f32.mrf.mxu0
    %v564 = vadd.f32 %v89, %v563
    %v565 = vpop.f32.mrf.mxu0
    %566 = vmatprep.mubr.bf16.mxu0 0
    %567 = vmatmul.mubr.bf16.gmra.mxu0 %v327
    %v568 = vpop.f32.mrf.mxu0
    %v569 = vadd.f32 %v89, %v568
    %v570 = vpop.f32.mrf.mxu0
    %v571 = vpop.f32.mrf.mxu0
    %v572 = vadd.f32 %v89, %v571
    %v573 = vpop.f32.mrf.mxu0
    %574 = vmatprep.mubr.bf16.mxu0 0
    %575 = vmatmul.mubr.bf16.gmra.mxu0 %v330
    %v576 = vpop.f32.mrf.mxu0
    %v577 = vadd.f32 %v89, %v576
    %v578 = vpop.f32.mrf.mxu0
    %v579 = vpop.f32.mrf.mxu0
    %v580 = vadd.f32 %v89, %v579
    %v581 = vpop.f32.mrf.mxu0
    %582 = vmatprep.mubr.bf16.mxu0 0
    %583 = vmatmul.mubr.bf16.gmra.mxu0 %v333
    %v584 = vpop.f32.mrf.mxu0
    %v585 = vadd.f32 %v89, %v584
    %v586 = vpop.f32.mrf.mxu0
    %v587 = vpop.f32.mrf.mxu0
    %v588 = vadd.f32 %v89, %v587
    %v589 = vpop.f32.mrf.mxu0
    %590 = vmatprep.mubr.bf16.mxu0 0
    %591 = vmatmul.mubr.bf16.gmra.mxu0 %v336
    %v592 = vpop.f32.mrf.mxu0
    %v593 = vadd.f32 %v89, %v592
    %v594 = vpop.f32.mrf.mxu0
    %v595 = vpop.f32.mrf.mxu0
    %v596 = vadd.f32 %v89, %v595
    %v597 = vpop.f32.mrf.mxu0
    %598 = vmatprep.mubr.bf16.mxu0 0
    %599 = vmatmul.mubr.bf16.gmra.mxu0 %v339
    %v600 = vpop.f32.mrf.mxu0
    %v601 = vadd.f32 %v89, %v600
    %v602 = vpop.f32.mrf.mxu0
    %v603 = vpop.f32.mrf.mxu0
    %v604 = vadd.f32 %v89, %v603
    %v605 = vpop.f32.mrf.mxu0
    %606 = vmatprep.mubr.bf16.mxu0 0
    %607 = vmatmul.mubr.bf16.gmra.mxu0 %v342
    %v608 = vpop.f32.mrf.mxu0
    %v609 = vadd.f32 %v89, %v608
    %v610 = vpop.f32.mrf.mxu0
    %v611 = vpop.f32.mrf.mxu0
    %v612 = vadd.f32 %v89, %v611
    %v613 = vpop.f32.mrf.mxu0
    %614 = vmatprep.mubr.bf16.mxu0 0
    %615 = vmatmul.mubr.bf16.gmra.mxu0 %v345
    %v616 = vpop.f32.mrf.mxu0
    %v617 = vadd.f32 %v89, %v616
    %v618 = vpop.f32.mrf.mxu0
    %v619 = vpop.f32.mrf.mxu0
    %v620 = vadd.f32 %v89, %v619
    %v621 = vpop.f32.mrf.mxu0
    %622 = vmatprep.mubr.bf16.mxu0 0
    %623 = vmatmul.mubr.bf16.gmra.mxu0 %v348
    %v624 = vpop.f32.mrf.mxu0
    %v625 = vadd.f32 %v89, %v624
    %v626 = vpop.f32.mrf.mxu0
    %v627 = vpop.f32.mrf.mxu0
    %v628 = vadd.f32 %v89, %v627
    %v629 = vpop.f32.mrf.mxu0
    %630 = vmatprep.mubr.bf16.mxu0 0
    %631 = vmatmul.mubr.bf16.gmra.mxu0 %v351
    %v632 = vpop.f32.mrf.mxu0
    %v633 = vadd.f32 %v89, %v632
    %v634 = vpop.f32.mrf.mxu0
    %v635 = vpop.f32.mrf.mxu0
    %v636 = vadd.f32 %v89, %v635
    %v637 = vpop.f32.mrf.mxu0
    %638 = vmatprep.mubr.bf16.mxu0 0
    %639 = vmatmul.mubr.bf16.gmra.mxu0 %v354
    %v640 = vpop.f32.mrf.mxu0
    %v641 = vadd.f32 %v89, %v640
    %v642 = vpop.f32.mrf.mxu0
    %v643 = vpop.f32.mrf.mxu0
    %v644 = vadd.f32 %v89, %v643
    %v645 = vpop.f32.mrf.mxu0
    %646 = vmatprep.mubr.bf16.mxu0 0
    %647 = vmatmul.mubr.bf16.gmra.mxu0 %v357
    %v648 = vpop.f32.mrf.mxu0
    %v649 = vadd.f32 %v89, %v648
    %v650 = vpop.f32.mrf.mxu0
    %v651 = vpop.f32.mrf.mxu0
    %v652 = vadd.f32 %v89, %v651
    %v653 = vpop.f32.mrf.mxu0
    %654 = vdwg.mxu0
    %v655 = vmax.f32 %v401, 0.0
    %v656 = vmax.f32 %v404, 0.0
    %v657 = vmax.f32 %v409, 0.0
    %v658 = vmax.f32 %v412, 0.0
    %v659 = vmax.f32 %v417, 0.0
    %v660 = vmax.f32 %v420, 0.0
    %v661 = vmax.f32 %v425, 0.0
    %v662 = vmax.f32 %v428, 0.0
    %v663 = vmax.f32 %v433, 0.0
    %v664 = vmax.f32 %v436, 0.0
    %v665 = vmax.f32 %v441, 0.0
    %v666 = vmax.f32 %v444, 0.0
    %v667 = vmax.f32 %v449, 0.0
    %v668 = vmax.f32 %v452, 0.0
    %v669 = vmax.f32 %v457, 0.0
    %v670 = vmax.f32 %v460, 0.0
    %v671 = vmax.f32 %v465, 0.0
    %v672 = vmax.f32 %v468, 0.0
    %v673 = vmax.f32 %v473, 0.0
    %v674 = vmax.f32 %v476, 0.0
    %v675 = vmax.f32 %v481, 0.0
    %v676 = vmax.f32 %v484, 0.0
    %v677 = vmax.f32 %v489, 0.0
    %v678 = vmax.f32 %v492, 0.0
    %v679 = vmax.f32 %v497, 0.0
    %v680 = vmax.f32 %v500, 0.0
    %v681 = vmax.f32 %v505, 0.0
    %v682 = vmax.f32 %v508, 0.0
    %v683 = vmax.f32 %v513, 0.0
    %v684 = vmax.f32 %v516, 0.0
    %v685 = vmax.f32 %v521, 0.0
    %v686 = vmax.f32 %v524, 0.0
    %v687 = vmax.f32 %v529, 0.0
    %v688 = vmax.f32 %v532, 0.0
    %v689 = vmax.f32 %v537, 0.0
    %v690 = vmax.f32 %v540, 0.0
    %v691 = vmax.f32 %v545, 0.0
    %v692 = vmax.f32 %v548, 0.0
    %v693 = vmax.f32 %v553, 0.0
    %v694 = vmax.f32 %v556, 0.0
    %v695 = vmax.f32 %v561, 0.0
    %v696 = vmax.f32 %v564, 0.0
    %v697 = vmax.f32 %v569, 0.0
    %v698 = vmax.f32 %v572, 0.0
    %v699 = vmax.f32 %v577, 0.0
    %v700 = vmax.f32 %v580, 0.0
    %v701 = vmax.f32 %v585, 0.0
    %v702 = vmax.f32 %v588, 0.0
    %v703 = vmax.f32 %v593, 0.0
    %v704 = vmax.f32 %v596, 0.0
    %v705 = vmax.f32 %v601, 0.0
    %v706 = vmax.f32 %v604, 0.0
    %v707 = vmax.f32 %v609, 0.0
    %v708 = vmax.f32 %v612, 0.0
    %v709 = vmax.f32 %v617, 0.0
    %v710 = vmax.f32 %v620, 0.0
    %v711 = vmax.f32 %v625, 0.0
    %v712 = vmax.f32 %v628, 0.0
    %v713 = vmax.f32 %v633, 0.0
    %v714 = vmax.f32 %v636, 0.0
    %v715 = vmax.f32 %v641, 0.0
    %v716 = vmax.f32 %v644, 0.0
    %v717 = vmax.f32 %v649, 0.0
    %v718 = vmax.f32 %v652, 0.0
    %v719 = vpack.c.bf16 %v656, %v655
    %v720 = vpack.c.bf16 %v658, %v657
    %v721 = vpack.c.bf16 %v660, %v659
    %v722 = vpack.c.bf16 %v662, %v661
    %v723 = vpack.c.bf16 %v664, %v663
    %v724 = vpack.c.bf16 %v666, %v665
    %v725 = vpack.c.bf16 %v668, %v667
    %v726 = vpack.c.bf16 %v670, %v669
    %v727 = vpack.c.bf16 %v672, %v671
    %v728 = vpack.c.bf16 %v674, %v673
    %v729 = vpack.c.bf16 %v676, %v675
    %v730 = vpack.c.bf16 %v678, %v677
    %v731 = vpack.c.bf16 %v680, %v679
    %v732 = vpack.c.bf16 %v682, %v681
    %v733 = vpack.c.bf16 %v684, %v683
    %v734 = vpack.c.bf16 %v686, %v685
    %v735 = vpack.c.bf16 %v688, %v687
    %v736 = vpack.c.bf16 %v690, %v689
    %v737 = vpack.c.bf16 %v692, %v691
    %v738 = vpack.c.bf16 %v694, %v693
    %v739 = vpack.c.bf16 %v696, %v695
    %v740 = vpack.c.bf16 %v698, %v697
    %v741 = vpack.c.bf16 %v700, %v699
    %v742 = vpack.c.bf16 %v702, %v701
    %v743 = vpack.c.bf16 %v704, %v703
    %v744 = vpack.c.bf16 %v706, %v705
    %v745 = vpack.c.bf16 %v708, %v707
    %v746 = vpack.c.bf16 %v710, %v709
    %v747 = vpack.c.bf16 %v712, %v711
    %v748 = vpack.c.bf16 %v714, %v713
    %v749 = vpack.c.bf16 %v716, %v715
    %v750 = vpack.c.bf16 %v718, %v717
    %v783 = vunpack.c.l.b16 %v719
    %v784 = vunpack.c.h.b16 %v719
    %v785 = vunpack.c.l.b16 %v720
    %v786 = vunpack.c.h.b16 %v720
    %v787 = vunpack.c.l.b16 %v721
    %v788 = vunpack.c.h.b16 %v721
    %v789 = vunpack.c.l.b16 %v722
    %v790 = vunpack.c.h.b16 %v722
    %v791 = vunpack.c.l.b16 %v723
    %v792 = vunpack.c.h.b16 %v723
    %v793 = vunpack.c.l.b16 %v724
    %v794 = vunpack.c.h.b16 %v724
    %v795 = vunpack.c.l.b16 %v725
    %v796 = vunpack.c.h.b16 %v725
    %v797 = vunpack.c.l.b16 %v726
    %v798 = vunpack.c.h.b16 %v726
    %v799 = vunpack.c.l.b16 %v727
    %v800 = vunpack.c.h.b16 %v727
    %v801 = vunpack.c.l.b16 %v728
    %v802 = vunpack.c.h.b16 %v728
    %v803 = vunpack.c.l.b16 %v729
    %v804 = vunpack.c.h.b16 %v729
    %v805 = vunpack.c.l.b16 %v730
    %v806 = vunpack.c.h.b16 %v730
    %v807 = vunpack.c.l.b16 %v731
    %v808 = vunpack.c.h.b16 %v731
    %v809 = vunpack.c.l.b16 %v732
    %v810 = vunpack.c.h.b16 %v732
    %v811 = vunpack.c.l.b16 %v733
    %v812 = vunpack.c.h.b16 %v733
    %v813 = vunpack.c.l.b16 %v734
    %v814 = vunpack.c.h.b16 %v734
    %v815 = vunpack.c.l.b16 %v735
    %v816 = vunpack.c.h.b16 %v735
    %v817 = vunpack.c.l.b16 %v736
    %v818 = vunpack.c.h.b16 %v736
    %v819 = vunpack.c.l.b16 %v737
    %v820 = vunpack.c.h.b16 %v737
    %v821 = vunpack.c.l.b16 %v738
    %v822 = vunpack.c.h.b16 %v738
    %v823 = vunpack.c.l.b16 %v739
    %v824 = vunpack.c.h.b16 %v739
    %v825 = vunpack.c.l.b16 %v740
    %v826 = vunpack.c.h.b16 %v740
    %v827 = vunpack.c.l.b16 %v741
    %v828 = vunpack.c.h.b16 %v741
    %v829 = vunpack.c.l.b16 %v742
    %v830 = vunpack.c.h.b16 %v742
    %v831 = vunpack.c.l.b16 %v743
    %v832 = vunpack.c.h.b16 %v743
    %v833 = vunpack.c.l.b16 %v744
    %v834 = vunpack.c.h.b16 %v744
    %v835 = vunpack.c.l.b16 %v745
    %v836 = vunpack.c.h.b16 %v745
    %v837 = vunpack.c.l.b16 %v746
    %v838 = vunpack.c.h.b16 %v746
    %v839 = vunpack.c.l.b16 %v747
    %v840 = vunpack.c.h.b16 %v747
    %v841 = vunpack.c.l.b16 %v748
    %v842 = vunpack.c.h.b16 %v748
    %v843 = vunpack.c.l.b16 %v749
    %v844 = vunpack.c.h.b16 %v749
    %v845 = vunpack.c.l.b16 %v750
    %v846 = vunpack.c.h.b16 %v750
    %v847 = vpack.c.b16 %v783, %v783
    %v848 = vpack.c.b16 %v784, %v784
    %v849 = vpack.c.b16 %v785, %v785
    %v850 = vpack.c.b16 %v786, %v786
    %v851 = vpack.c.b16 %v787, %v787
    %v852 = vpack.c.b16 %v788, %v788
    %v853 = vpack.c.b16 %v789, %v789
    %v854 = vpack.c.b16 %v790, %v790
    %v855 = vpack.c.b16 %v791, %v791
    %v856 = vpack.c.b16 %v792, %v792
    %v857 = vpack.c.b16 %v793, %v793
    %v858 = vpack.c.b16 %v794, %v794
    %v859 = vpack.c.b16 %v795, %v795
    %v860 = vpack.c.b16 %v796, %v796
    %v861 = vpack.c.b16 %v797, %v797
    %v862 = vpack.c.b16 %v798, %v798
    %v863 = vpack.c.b16 %v799, %v799
    %v864 = vpack.c.b16 %v800, %v800
    %v865 = vpack.c.b16 %v801, %v801
    %v866 = vpack.c.b16 %v802, %v802
    %v867 = vpack.c.b16 %v803, %v803
    %v868 = vpack.c.b16 %v804, %v804
    %v869 = vpack.c.b16 %v805, %v805
    %v870 = vpack.c.b16 %v806, %v806
    %v871 = vpack.c.b16 %v807, %v807
    %v872 = vpack.c.b16 %v808, %v808
    %v873 = vpack.c.b16 %v809, %v809
    %v874 = vpack.c.b16 %v810, %v810
    %v875 = vpack.c.b16 %v811, %v811
    %v876 = vpack.c.b16 %v812, %v812
    %v877 = vpack.c.b16 %v813, %v813
    %v878 = vpack.c.b16 %v814, %v814
    %v879 = vpack.c.b16 %v815, %v815
    %v880 = vpack.c.b16 %v816, %v816
    %v881 = vpack.c.b16 %v817, %v817
    %v882 = vpack.c.b16 %v818, %v818
    %v883 = vpack.c.b16 %v819, %v819
    %v884 = vpack.c.b16 %v820, %v820
    %v885 = vpack.c.b16 %v821, %v821
    %v886 = vpack.c.b16 %v822, %v822
    %v887 = vpack.c.b16 %v823, %v823
    %v888 = vpack.c.b16 %v824, %v824
    %v889 = vpack.c.b16 %v825, %v825
    %v890 = vpack.c.b16 %v826, %v826
    %v891 = vpack.c.b16 %v827, %v827
    %v892 = vpack.c.b16 %v828, %v828
    %v893 = vpack.c.b16 %v829, %v829
    %v894 = vpack.c.b16 %v830, %v830
    %v895 = vpack.c.b16 %v831, %v831
    %v896 = vpack.c.b16 %v832, %v832
    %v897 = vpack.c.b16 %v833, %v833
    %v898 = vpack.c.b16 %v834, %v834
    %v899 = vpack.c.b16 %v835, %v835
    %v900 = vpack.c.b16 %v836, %v836
    %v901 = vpack.c.b16 %v837, %v837
    %v902 = vpack.c.b16 %v838, %v838
    %v903 = vpack.c.b16 %v839, %v839
    %v904 = vpack.c.b16 %v840, %v840
    %v905 = vpack.c.b16 %v841, %v841
    %v906 = vpack.c.b16 %v842, %v842
    %v907 = vpack.c.b16 %v843, %v843
    %v908 = vpack.c.b16 %v844, %v844
    %v909 = vpack.c.b16 %v845, %v845
    %v910 = vpack.c.b16 %v846, %v846
    %vm975 = vcmask 388096
    %976 = vst.msk [vmem:[#allocation2] sm:$0xf] %vm975, %v847
    %977 = vst.msk [vmem:[#allocation2 + $0x4] sm:$0xf] %vm975, %v848
    %978 = vst.msk [vmem:[#allocation2 + $0x8] sm:$0xf] %vm975, %v849
    %979 = vst.msk [vmem:[#allocation2 + $0xc] sm:$0xf] %vm975, %v850
    %980 = vst.msk [vmem:[#allocation2 + $0x10] sm:$0xf] %vm975, %v851
    %981 = vst.msk [vmem:[#allocation2 + $0x14] sm:$0xf] %vm975, %v852
    %982 = vst.msk [vmem:[#allocation2 + $0x18] sm:$0xf] %vm975, %v853
    %983 = vst.msk [vmem:[#allocation2 + $0x1c] sm:$0xf] %vm975, %v854
    %984 = vst.msk [vmem:[#allocation2 + $0x20] sm:$0xf] %vm975, %v855
    %985 = vst.msk [vmem:[#allocation2 + $0x24] sm:$0xf] %vm975, %v856
    %986 = vst.msk [vmem:[#allocation2 + $0x28] sm:$0xf] %vm975, %v857
    %987 = vst.msk [vmem:[#allocation2 + $0x2c] sm:$0xf] %vm975, %v858
    %988 = vst.msk [vmem:[#allocation2 + $0x30] sm:$0xf] %vm975, %v859
    %989 = vst.msk [vmem:[#allocation2 + $0x34] sm:$0xf] %vm975, %v860
    %990 = vst.msk [vmem:[#allocation2 + $0x38] sm:$0xf] %vm975, %v861
    %991 = vst.msk [vmem:[#allocation2 + $0x3c] sm:$0xf] %vm975, %v862
    %992 = vst.msk [vmem:[#allocation2 + $0x40] sm:$0xf] %vm975, %v863
    %993 = vst.msk [vmem:[#allocation2 + $0x44] sm:$0xf] %vm975, %v864
    %994 = vst.msk [vmem:[#allocation2 + $0x48] sm:$0xf] %vm975, %v865
    %995 = vst.msk [vmem:[#allocation2 + $0x4c] sm:$0xf] %vm975, %v866
    %996 = vst.msk [vmem:[#allocation2 + $0x50] sm:$0xf] %vm975, %v867
    %997 = vst.msk [vmem:[#allocation2 + $0x54] sm:$0xf] %vm975, %v868
    %998 = vst.msk [vmem:[#allocation2 + $0x58] sm:$0xf] %vm975, %v869
    %999 = vst.msk [vmem:[#allocation2 + $0x5c] sm:$0xf] %vm975, %v870
    %1000 = vst.msk [vmem:[#allocation2 + $0x60] sm:$0xf] %vm975, %v871
    %1001 = vst.msk [vmem:[#allocation2 + $0x64] sm:$0xf] %vm975, %v872
    %1002 = vst.msk [vmem:[#allocation2 + $0x68] sm:$0xf] %vm975, %v873
    %1003 = vst.msk [vmem:[#allocation2 + $0x6c] sm:$0xf] %vm975, %v874
    %1004 = vst.msk [vmem:[#allocation2 + $0x70] sm:$0xf] %vm975, %v875
    %1005 = vst.msk [vmem:[#allocation2 + $0x74] sm:$0xf] %vm975, %v876
    %1006 = vst.msk [vmem:[#allocation2 + $0x78] sm:$0xf] %vm975, %v877
    %1007 = vst.msk [vmem:[#allocation2 + $0x7c] sm:$0xf] %vm975, %v878
    %1008 = vst.msk [vmem:[#allocation2 + $0x80] sm:$0xf] %vm975, %v879
    %1009 = vst.msk [vmem:[#allocation2 + $0x84] sm:$0xf] %vm975, %v880
    %1010 = vst.msk [vmem:[#allocation2 + $0x88] sm:$0xf] %vm975, %v881
    %1011 = vst.msk [vmem:[#allocation2 + $0x8c] sm:$0xf] %vm975, %v882
    %1012 = vst.msk [vmem:[#allocation2 + $0x90] sm:$0xf] %vm975, %v883
    %1013 = vst.msk [vmem:[#allocation2 + $0x94] sm:$0xf] %vm975, %v884
    %1014 = vst.msk [vmem:[#allocation2 + $0x98] sm:$0xf] %vm975, %v885
    %1015 = vst.msk [vmem:[#allocation2 + $0x9c] sm:$0xf] %vm975, %v886
    %1016 = vst.msk [vmem:[#allocation2 + $0xa0] sm:$0xf] %vm975, %v887
    %1017 = vst.msk [vmem:[#allocation2 + $0xa4] sm:$0xf] %vm975, %v888
    %1018 = vst.msk [vmem:[#allocation2 + $0xa8] sm:$0xf] %vm975, %v889
    %1019 = vst.msk [vmem:[#allocation2 + $0xac] sm:$0xf] %vm975, %v890
    %1020 = vst.msk [vmem:[#allocation2 + $0xb0] sm:$0xf] %vm975, %v891
    %1021 = vst.msk [vmem:[#allocation2 + $0xb4] sm:$0xf] %vm975, %v892
    %1022 = vst.msk [vmem:[#allocation2 + $0xb8] sm:$0xf] %vm975, %v893
    %1023 = vst.msk [vmem:[#allocation2 + $0xbc] sm:$0xf] %vm975, %v894
    %1024 = vst.msk [vmem:[#allocation2 + $0xc0] sm:$0xf] %vm975, %v895
    %1025 = vst.msk [vmem:[#allocation2 + $0xc4] sm:$0xf] %vm975, %v896
    %1026 = vst.msk [vmem:[#allocation2 + $0xc8] sm:$0xf] %vm975, %v897
    %1027 = vst.msk [vmem:[#allocation2 + $0xcc] sm:$0xf] %vm975, %v898
    %1028 = vst.msk [vmem:[#allocation2 + $0xd0] sm:$0xf] %vm975, %v899
    %1029 = vst.msk [vmem:[#allocation2 + $0xd4] sm:$0xf] %vm975, %v900
    %1030 = vst.msk [vmem:[#allocation2 + $0xd8] sm:$0xf] %vm975, %v901
    %1031 = vst.msk [vmem:[#allocation2 + $0xdc] sm:$0xf] %vm975, %v902
    %1032 = vst.msk [vmem:[#allocation2 + $0xe0] sm:$0xf] %vm975, %v903
    %1033 = vst.msk [vmem:[#allocation2 + $0xe4] sm:$0xf] %vm975, %v904
    %1034 = vst.msk [vmem:[#allocation2 + $0xe8] sm:$0xf] %vm975, %v905
    %1035 = vst.msk [vmem:[#allocation2 + $0xec] sm:$0xf] %vm975, %v906
    %1036 = vst.msk [vmem:[#allocation2 + $0xf0] sm:$0xf] %vm975, %v907
    %1037 = vst.msk [vmem:[#allocation2 + $0xf4] sm:$0xf] %vm975, %v908
    %1038 = vst.msk [vmem:[#allocation2 + $0xf8] sm:$0xf] %vm975, %v909
    %1039 = vst.msk [vmem:[#allocation2 + $0xfc] sm:$0xf] %vm975, %v910
    // Predicated region
    $region14: #{repvgg_block.1} parent=1 // pred_check
      _
    $region15: #{repvgg_block.1} parent=1 // pred_check_branch
      %1041 = sbr.rel (0) target = $region17
    $region16: #{repvgg_block.1} parent=1 // pred_region
      %s1043 = ssub.s32 4096, 4096
      %1044 = vsyncadd [#allocation3], %s1043
      %s1045 = sshll.u32 [#allocation2], 4
      %s1046 = int_to_ptr.vmem [resolvable:$true] %s1045
      %1051 = dma.vmem_to_hbm [thread:$0]  %s1046, 4096, %s3, [#allocation3], 64, 64, 4
    $region17: #{repvgg_block.1} parent=1 // pred_fallthru
      _
    // Predicated region
    $region18: #{repvgg_block.1} parent=1 // pred_check
      _
    $region19: #{repvgg_block.1} parent=1 // pred_check_branch
      %1053 = sbr.rel (0) target = $region21
    $region20: #{repvgg_block.1} parent=1 // pred_region
      %1054 = dma.done [#allocation3], 4096
    $region21: #{repvgg_block.1} parent=1 // pred_fallthru
      _
    %1055 = vsyncpa [#allocation3], 1

</llo_original>
